<compile_context>
chip_gen: v6e
topology: v6e:2x2x1
jax: 0.10.0
libtpu: 0.0.40
codegen_flags: <defaults>
</compile_context>

<pallas_src>
import functools

import jax
import jax.numpy as jnp
from jax import lax
from jax.experimental import pallas as pl
from jax.experimental.pallas import tpu as pltpu

HEAD_DIM = 128
VMEM_LIMIT = 32 * 1024 * 1024


def _round8(n):
    return ((n + 7) // 8) * 8


def _bn_fold(bn, eps=1e-5):
    scale = bn['gamma'] / jnp.sqrt(bn['var'] + eps)
    return scale, bn['beta'] - bn['mean'] * scale


def _cost(flops, transcendentals, bytes_accessed):
    return pl.CostEstimate(flops=int(flops), transcendentals=int(transcendentals),
                           bytes_accessed=int(bytes_accessed))


# ----------------------------------------------------------------------------
# Pallas kernels
# ----------------------------------------------------------------------------

def _sepconv_kernel(x_ref, dww_ref, dws_ref, dwt_ref, pww_ref, pwt_ref, o_ref,
                    *, H, W, K, relu, sigmoid):
    """Fused SeparableConv2d: depthwise KxK (+folded BN) feeding the 1x1 MXU matmul
    (out-BN folded into the weights) + optional ReLU / sigmoid.  One batch element
    per grid step; the depthwise result never leaves VMEM."""
    C = x_ref.shape[-1]
    Cout = o_ref.shape[-1]
    acc = jnp.zeros((H, W, C), jnp.float32)
    for i in range(K):
        for j in range(K):
            acc = acc + x_ref[0, i:i + H, j:j + W, :] * dww_ref[i, j, :]
    acc = acc * dws_ref[...] + dwt_ref[...]
    # W is padded to a multiple of 8 by the wrapper => this reshape is layout-preserving.
    y = jnp.dot(acc.reshape(H * W, C).astype(jnp.bfloat16), pww_ref[...],
                preferred_element_type=jnp.float32)
    y = y + pwt_ref[...]
    if relu:
        y = jnp.maximum(y, 0.0)
    if sigmoid:
        y = jax.nn.sigmoid(y)
    o_ref[0] = y.reshape(H, W, Cout)


def _complex_up_kernel(x_ref, dw3_ref, s3_ref, t3_ref, pw3_ref, b3_ref,
                       dw5_ref, s5_ref, t5_ref, pw5_ref, b5_ref, o_ref, *, H, W):
    """Fused ComplexUpsample conv part: 3x3 sepconv+BN+ReLU and 5x5 sepconv+BN+ReLU on the
    same input, summed.  (Bilinear 2x interleave stays as XLA glue on the output.)"""
    C = x_ref.shape[-1]
    Cout = o_ref.shape[-1]
    a = jnp.zeros((H, W, C), jnp.float32)
    for i in range(3):
        for j in range(3):
            a = a + x_ref[0, i + 1:i + 1 + H, j + 1:j + 1 + W, :] * dw3_ref[i, j, :]
    a = a * s3_ref[...] + t3_ref[...]
    b = jnp.zeros((H, W, C), jnp.float32)
    for i in range(5):
        for j in range(5):
            b = b + x_ref[0, i:i + H, j:j + W, :] * dw5_ref[i, j, :]
    b = b * s5_ref[...] + t5_ref[...]
    y1 = jnp.dot(a.reshape(H * W, C).astype(jnp.bfloat16), pw3_ref[...],
                 preferred_element_type=jnp.float32) + b3_ref[...]
    y2 = jnp.dot(b.reshape(H * W, C).astype(jnp.bfloat16), pw5_ref[...],
                 preferred_element_type=jnp.float32) + b5_ref[...]
    z = jnp.maximum(y1, 0.0) + jnp.maximum(y2, 0.0)
    o_ref[0] = z.reshape(H, W, Cout)


def _head_kernel(x_ref, dww_ref, aff_ref, pww_ref, bias_ref, sig_ref, o_ref, *, H, W):
    """Fused CenterNetHead: three depthwise-3x3 passes (cls/wh/offset) plus the full 3x3
    iou conv expressed as a depthwise pass + channel-sum column, all feeding ONE lane-dense
    (H*W, 128) MXU matmul, bias, and per-column masked sigmoid (cls columns + iou column)."""
    C = x_ref.shape[-1]
    OUT = o_ref.shape[-1]
    acc = jnp.zeros((H * W, OUT), jnp.float32)
    for br in range(4):
        d = jnp.zeros((H, W, C), jnp.float32)
        for i in range(3):
            for j in range(3):
                d = d + x_ref[0, i:i + H, j:j + W, :] * dww_ref[br, i, j, :]
        d = d * aff_ref[br, 0, :] + aff_ref[br, 1, :]
        acc = acc + jnp.dot(d.reshape(H * W, C).astype(jnp.bfloat16), pww_ref[br],
                            preferred_element_type=jnp.float32)
    y = acc + bias_ref[...]
    sm = sig_ref[...]
    y = sm * jax.nn.sigmoid(y) + (1.0 - sm) * y
    o_ref[0] = y.reshape(H, W, OUT)


def _decode_kernel(h_ref, o_ref, pad_ref, *, H, W, nc, stride):
    slab = h_ref[...]                                 # (H, W, 128); cls/iou already sigmoided
    heat = slab[:, :, 0:nc]
    hm = jnp.max(heat, axis=-1)                       # class-wise max score
    iotf = lax.broadcasted_iota(jnp.float32, (H, W, nc), 2)
    label = jnp.min(jnp.where(heat == hm[..., None], iotf, jnp.float32(nc)), axis=-1)

    # 3x3 / stride-1 max-pool NMS with -inf border via padded VMEM scratch.
    # NOTE: keep this full init unconditional -- the overlapping offset-by-1 reads below
    # rely on every scratch element being freshly written each invocation.
    pad_ref[...] = jnp.full((H + 2, W + 2), -jnp.inf, jnp.float32)
    pad_ref[1:H + 1, 1:W + 1] = hm
    hmax = hm
    for di in range(3):
        for dj in range(3):
            hmax = jnp.maximum(hmax, pad_ref[di:di + H, dj:dj + W])
    keep = (hm == hmax).astype(jnp.float32)
    iou = jax.nn.sigmoid(slab[:, :, nc + 4])          # decode re-sigmoids iou (matches torch)
    score = hm * keep * iou

    rows = lax.broadcasted_iota(jnp.int32, (H, W), 0).astype(jnp.float32)
    cols = lax.broadcasted_iota(jnp.int32, (H, W), 1).astype(jnp.float32)
    xc = cols + slab[:, :, nc + 2]
    yc = rows + slab[:, :, nc + 3]
    hw = slab[:, :, nc] * 0.5
    hh = slab[:, :, nc + 1] * 0.5
    zero = jnp.zeros_like(score)
    o_ref[...] = jnp.stack([(xc - hw) * stride, (yc - hh) * stride,
                            (xc + hw) * stride, (yc + hh) * stride,
                            score, label, zero, zero], axis=-1)


# ----------------------------------------------------------------------------
# Wrappers around the kernels
# ----------------------------------------------------------------------------

def sepconv_bn_act(x, p, k, pad, out_bn=None, relu=False, sigmoid=False):
    """SeparableConv2d (+ optional trailing BN/ReLU/sigmoid) as one fused pallas_call."""
    N, H, W, Cin = x.shape
    Wk = _round8(W)
    xp = jnp.pad(x, ((0, 0), (pad, pad), (pad, pad + (Wk - W)), (0, 0)))
    s1, t1 = _bn_fold(p['bn1'])
    dw_shift = p['dw_b'] * s1 + t1 if 'dw_b' in p else t1
    pw_w = p['pw_w']
    Cout = pw_w.shape[1]
    pw_b = p.get('pw_b', jnp.zeros((Cout,), jnp.float32))
    if out_bn is not None:
        s2, t2 = _bn_fold(out_bn)
        eff_w = pw_w * s2[None, :]
        eff_b = pw_b * s2 + t2
    else:
        eff_w, eff_b = pw_w, pw_b

    kern = functools.partial(_sepconv_kernel, H=H, W=Wk, K=k, relu=relu, sigmoid=sigmoid)
    flops = N * (2 * k * k * H * Wk * Cin + 2 * H * Wk * Cin * Cout)
    byts = xp.size * 4 + N * H * Wk * Cout * 4 + eff_w.size * 2
    out = pl.pallas_call(
        kern,
        out_shape=jax.ShapeDtypeStruct((N, H, Wk, Cout), jnp.float32),
        grid=(N,),
        in_specs=[
            pl.BlockSpec((1, H + 2 * pad, Wk + 2 * pad, Cin), lambda n: (n, 0, 0, 0)),
            pl.BlockSpec((k, k, Cin), lambda n: (0, 0, 0)),
            pl.BlockSpec((1, 1, Cin), lambda n: (0, 0, 0)),
            pl.BlockSpec((1, 1, Cin), lambda n: (0, 0, 0)),
            pl.BlockSpec((Cin, Cout), lambda n: (0, 0)),
            pl.BlockSpec((1, Cout), lambda n: (0, 0)),
        ],
        out_specs=pl.BlockSpec((1, H, Wk, Cout), lambda n: (n, 0, 0, 0)),
        compiler_params=pltpu.CompilerParams(
            dimension_semantics=("parallel",), vmem_limit_bytes=VMEM_LIMIT),
        cost_estimate=_cost(flops, H * Wk * Cout if sigmoid else 0, byts),
    )(xp, p['dw_w'], s1.reshape(1, 1, Cin), dw_shift.reshape(1, 1, Cin),
      eff_w.astype(jnp.bfloat16), eff_b.reshape(1, Cout))
    return out[:, :, :W, :]


def _upsample2x_axis(x, axis):
    n = x.shape[axis]
    first = lax.slice_in_dim(x, 0, 1, axis=axis)
    last = lax.slice_in_dim(x, n - 1, n, axis=axis)
    prev = jnp.concatenate([first, lax.slice_in_dim(x, 0, n - 1, axis=axis)], axis=axis)
    nxt = jnp.concatenate([lax.slice_in_dim(x, 1, n, axis=axis), last], axis=axis)
    even = 0.25 * prev + 0.75 * x          # out[2i]   = 0.25*x[i-1] + 0.75*x[i]
    odd = 0.75 * x + 0.25 * nxt            # out[2i+1] = 0.75*x[i]   + 0.25*x[i+1]
    out = jnp.stack([even, odd], axis=axis + 1)
    return out.reshape(x.shape[:axis] + (2 * n,) + x.shape[axis + 1:])


def upsample2x_bilinear(x):
    # F.interpolate(scale_factor=2, mode='bilinear', align_corners=False): XLA glue.
    # TODO(synk): could be folded into the consuming conv kernel via pltpu.roll shifts.
    return _upsample2x_axis(_upsample2x_axis(x, 1), 2)


def complex_upsample(x, p):
    N, H, W, Cin = x.shape
    Wk = _round8(W)
    xp = jnp.pad(x, ((0, 0), (2, 2), (2, 2 + (Wk - W)), (0, 0)))

    def branch(q, out_bn):
        s1, t1 = _bn_fold(q['bn1'])
        s2, t2 = _bn_fold(out_bn)
        return q['dw_w'], s1, t1, q['pw_w'] * s2[None, :], t2

    dw3, s31, t31, w3, b3 = branch(p['conv1'], p['conv1_bn'])
    dw5, s51, t51, w5, b5 = branch(p['conv2'], p['conv2_bn'])
    Cout = w3.shape[1]
    kern = functools.partial(_complex_up_kernel, H=H, W=Wk)
    flops = N * (2 * (9 + 25) * H * Wk * Cin + 4 * H * Wk * Cin * Cout)
    byts = xp.size * 4 + N * H * Wk * Cout * 4 + (w3.size + w5.size) * 2
    z = pl.pallas_call(
        kern,
        out_shape=jax.ShapeDtypeStruct((N, H, Wk, Cout), jnp.float32),
        grid=(N,),
        in_specs=[
            pl.BlockSpec((1, H + 4, Wk + 4, Cin), lambda n: (n, 0, 0, 0)),
            pl.BlockSpec((3, 3, Cin), lambda n: (0, 0, 0)),
            pl.BlockSpec((1, 1, Cin), lambda n: (0, 0, 0)),
            pl.BlockSpec((1, 1, Cin), lambda n: (0, 0, 0)),
            pl.BlockSpec((Cin, Cout), lambda n: (0, 0)),
            pl.BlockSpec((1, Cout), lambda n: (0, 0)),
            pl.BlockSpec((5, 5, Cin), lambda n: (0, 0, 0)),
            pl.BlockSpec((1, 1, Cin), lambda n: (0, 0, 0)),
            pl.BlockSpec((1, 1, Cin), lambda n: (0, 0, 0)),
            pl.BlockSpec((Cin, Cout), lambda n: (0, 0)),
            pl.BlockSpec((1, Cout), lambda n: (0, 0)),
        ],
        out_specs=pl.BlockSpec((1, H, Wk, Cout), lambda n: (n, 0, 0, 0)),
        compiler_params=pltpu.CompilerParams(
            dimension_semantics=("parallel",), vmem_limit_bytes=VMEM_LIMIT),
        cost_estimate=_cost(flops, 0, byts),
    )(xp, dw3, s31.reshape(1, 1, Cin), t31.reshape(1, 1, Cin),
      w3.astype(jnp.bfloat16), b3.reshape(1, Cout),
      dw5, s51.reshape(1, 1, Cin), t51.reshape(1, 1, Cin),
      w5.astype(jnp.bfloat16), b5.reshape(1, Cout))
    return upsample2x_bilinear(z[:, :, :W, :])


def fused_head(x, p, nc):
    """All four head branches in one lane-dense pallas_call -> (N, H, W, 128) slab with
    columns [0:nc]=cls(sig), [nc:nc+2]=wh, [nc+2:nc+4]=offset, [nc+4]=iou(sig)."""
    N, H, W, C = x.shape
    OUT = HEAD_DIM
    Wk = _round8(W)
    xp = jnp.pad(x, ((0, 0), (1, 1), (1, 1 + (Wk - W)), (0, 0)))

    def sep_branch(q):
        s1, t1 = _bn_fold(q['bn1'])
        return q['dw_w'], s1, q['dw_b'] * s1 + t1

    dwc, sc, tc = sep_branch(p['cls'])
    dww, sw, tw = sep_branch(p['wh'])
    dwo, so, to = sep_branch(p['offset'])
    ones = jnp.ones((C,), jnp.float32)
    zeros = jnp.zeros((C,), jnp.float32)
    dw_all = jnp.stack([dwc, dww, dwo, p['iou_w']], axis=0)                  # (4,3,3,C)
    aff = jnp.stack([jnp.stack([sc, tc]), jnp.stack([sw, tw]),
                     jnp.stack([so, to]), jnp.stack([ones, zeros])], axis=0)  # (4,2,C)
    pw = jnp.zeros((4, C, OUT), jnp.float32)
    pw = pw.at[0, :, 0:nc].set(p['cls']['pw_w'])
    pw = pw.at[1, :, nc:nc + 2].set(p['wh']['pw_w'])
    pw = pw.at[2, :, nc + 2:nc + 4].set(p['offset']['pw_w'])
    pw = pw.at[3, :, nc + 4].set(1.0)                                        # iou channel-sum
    bias = jnp.zeros((OUT,), jnp.float32)
    bias = bias.at[0:nc].set(p['cls']['pw_b'])
    bias = bias.at[nc:nc + 2].set(p['wh']['pw_b'])
    bias = bias.at[nc + 2:nc + 4].set(p['offset']['pw_b'])
    bias = bias.at[nc + 4].set(p['iou_b'][0])
    sig = jnp.zeros((OUT,), jnp.float32).at[0:nc].set(1.0).at[nc + 4].set(1.0)

    kern = functools.partial(_head_kernel, H=H, W=Wk)
    flops = N * (4 * 2 * 9 * H * Wk * C + 4 * 2 * H * Wk * C * OUT)
    byts = xp.size * 4 + N * H * Wk * OUT * 4 + pw.size * 2
    slab = pl.pallas_call(
        kern,
        out_shape=jax.ShapeDtypeStruct((N, H, Wk, OUT), jnp.float32),
        grid=(N,),
        in_specs=[
            pl.BlockSpec((1, H + 2, Wk + 2, C), lambda n: (n, 0, 0, 0)),
            pl.BlockSpec((4, 3, 3, C), lambda n: (0, 0, 0, 0)),
            pl.BlockSpec((4, 2, C), lambda n: (0, 0, 0)),
            pl.BlockSpec((4, C, OUT), lambda n: (0, 0, 0)),
            pl.BlockSpec((1, OUT), lambda n: (0, 0)),
            pl.BlockSpec((1, OUT), lambda n: (0, 0)),
        ],
        out_specs=pl.BlockSpec((1, H, Wk, OUT), lambda n: (n, 0, 0, 0)),
        compiler_params=pltpu.CompilerParams(
            dimension_semantics=("parallel",), vmem_limit_bytes=VMEM_LIMIT),
        cost_estimate=_cost(flops, N * H * Wk * OUT, byts),
    )(xp, dw_all, aff, pw.astype(jnp.bfloat16), bias.reshape(1, OUT), sig.reshape(1, OUT))
    return slab[:, :, :W, :]


def decode_from_slab(slab, nc, *, stride=4, K=100):
    N, H, W, _ = slab.shape
    assert N == 1, "reference decode() gathers with top_index[0] (batch == 1)"
    kern = functools.partial(_decode_kernel, H=H, W=W, nc=nc, stride=float(stride))
    det_map = pl.pallas_call(
        kern,
        out_shape=jax.ShapeDtypeStruct((H, W, 8), jnp.float32),
        scratch_shapes=[pltpu.VMEM((H + 2, W + 2), jnp.float32)],
        compiler_params=pltpu.CompilerParams(vmem_limit_bytes=VMEM_LIMIT),
    )(slab[0])
    flat = det_map.reshape(H * W, 8)
    top_score, top_index = lax.top_k(flat[:, 4].reshape(1, H * W), K)   # torch.topk glue
    picked = flat[top_index[0]]                                         # (K, 8)
    return jnp.concatenate([picked[None, :, :4], top_score[..., None],
                            picked[None, :, 5:6]], axis=2)


# ----------------------------------------------------------------------------
# Module composition
# ----------------------------------------------------------------------------

def fpn_forward(fms, p):
    c2, c3, c4, c5 = fms
    c4_lat = sepconv_bn_act(c4, p['lat4'], 5, 2, out_bn=p['lat4_bn'], relu=True)
    c3_lat = sepconv_bn_act(c3, p['lat3'], 5, 2, out_bn=p['lat3_bn'], relu=True)
    c2_lat = sepconv_bn_act(c2, p['lat2'], 5, 2, out_bn=p['lat2_bn'], relu=True)
    up5 = complex_upsample(c5, p['up5'])
    p4 = jnp.concatenate([c4_lat, up5], axis=-1)
    up4 = complex_upsample(p4, p['up4'])
    p3 = jnp.concatenate([c3_lat, up4], axis=-1)
    up3 = complex_upsample(p3, p['up3'])
    return jnp.concatenate([c2_lat, up3], axis=-1)


def centernet_forward(fms, params, *, inference=True, stride=4, K=100):
    nc = params['cls']['pw_w'].shape[1]
    p2 = fpn_forward(fms, params)
    slab = fused_head(p2, params, nc)
    if not inference:
        cls = slab[..., :nc]
        wh = slab[..., nc:nc + 2]
        offset = slab[..., nc + 2:nc + 4]
        iou = slab[..., nc + 4]
        return cls, wh, offset, iou
    return decode_from_slab(slab, nc, stride=stride, K=K)


# ----------------------------------------------------------------------------
# Deterministic parameter initialization
# ----------------------------------------------------------------------------

def _make_bn(key, c):
    k1, k2, k3, k4 = jax.random.split(key, 4)
    return dict(gamma=1.0 + 0.1 * jax.random.normal(k1, (c,), jnp.float32),
                beta=0.1 * jax.random.normal(k2, (c,), jnp.float32),
                mean=0.1 * jax.random.normal(k3, (c,), jnp.float32),
                var=1.0 + 0.1 * jax.random.uniform(k4, (c,), jnp.float32))


def _make_sepconv(key, cin, cout, k, bias, std=0.05):
    ks = jax.random.split(key, 5)
    p = dict(dw_w=std * jax.random.normal(ks[0], (k, k, cin), jnp.float32),
             bn1=_make_bn(ks[1], cin),
             pw_w=std * jax.random.normal(ks[2], (cin, cout), jnp.float32))
    if bias:
        p['dw_b'] = std * jax.random.normal(ks[3], (cin,), jnp.float32)
        p['pw_b'] = std * jax.random.normal(ks[4], (cout,), jnp.float32)
    return p


def make_params(key, input_dims, nc):
    keys = iter(jax.random.split(key, 40))
    half = HEAD_DIM // 2
    p = {}
    for name, cin in (('lat2', input_dims[0]), ('lat3', input_dims[1]), ('lat4', input_dims[2])):
        p[name] = _make_sepconv(next(keys), cin, half, 5, bias=False)
        p[name + '_bn'] = _make_bn(next(keys), half)

    def make_up(cin, cout):
        return dict(conv1=_make_sepconv(next(keys), cin, cout, 3, bias=False),
                    conv1_bn=_make_bn(next(keys), cout),
                    conv2=_make_sepconv(next(keys), cin, cout, 5, bias=False),
                    conv2_bn=_make_bn(next(keys), cout))

    p['up3'] = make_up(HEAD_DIM, half)
    p['up4'] = make_up(HEAD_DIM, half)
    p['up5'] = make_up(input_dims[3], half)

    # CenterNetHead (normal_init on cls/wh pointwise: std=0.01, bias -2.19 / 0)
    p['cls'] = _make_sepconv(next(keys), HEAD_DIM, nc, 3, bias=True)
    p['cls']['pw_w'] = 0.01 * jax.random.normal(next(keys), (HEAD_DIM, nc), jnp.float32)
    p['cls']['pw_b'] = jnp.full((nc,), -2.19, jnp.float32)
    p['wh'] = _make_sepconv(next(keys), HEAD_DIM, 2, 3, bias=True)
    p['wh']['pw_w'] = 0.01 * jax.random.normal(next(keys), (HEAD_DIM, 2), jnp.float32)
    p['wh']['pw_b'] = jnp.zeros((2,), jnp.float32)
    p['offset'] = _make_sepconv(next(keys), HEAD_DIM, 2, 3, bias=True)
    p['iou_w'] = 0.05 * jax.random.normal(next(keys), (3, 3, HEAD_DIM), jnp.float32)
    p['iou_b'] = 0.1 * jax.random.normal(next(keys), (1,), jnp.float32)
    return p


if __name__ == "__main__":
    key = jax.random.PRNGKey(0)
    nc = 4
    input_dims = [8, 16, 24, 32]     # synthetic backbone channel dims for c2..c5
    sizes = [16, 8, 4, 2]            # strides 4/8/16/32 of a 64x64 input image
    N = 1                            # reference decode() assumes batch == 1
    k_feat, k_par = jax.random.split(key)
    fkeys = jax.random.split(k_feat, 4)
    fms = tuple(jax.random.normal(fk, (N, s, s, c), jnp.float32)
                for fk, s, c in zip(fkeys, sizes, input_dims))
    params = make_params(k_par, input_dims, nc)

    det = centernet_forward(fms, params, inference=True, stride=4, K=100)
    det = jax.block_until_ready(det)
    assert det.shape == (N, 100, 6) and det.dtype == jnp.float32
    print("KERNEL_OK")
</pallas_src>

<mosaic_0001>
module attributes {stable_mosaic.version = 11 : i64} {
  func.func @_sepconv_kernel(%arg0: i32, %arg1: memref<1x8x12x24xf32, #tpu.memory_space<vmem>>, %arg2: memref<5x5x24xf32, #tpu.memory_space<vmem>>, %arg3: memref<1x1x24xf32, #tpu.memory_space<vmem>>, %arg4: memref<1x1x24xf32, #tpu.memory_space<vmem>>, %arg5: memref<24x64xbf16, #tpu.memory_space<vmem>>, %arg6: memref<1x64xf32, #tpu.memory_space<vmem>>, %arg7: memref<1x4x8x64xf32, #tpu.memory_space<vmem>>) attributes {dimension_semantics = [#tpu.dimension_semantics<parallel>], iteration_bounds = array<i64: 1>, scalar_prefetch = 0 : i64, scratch_operands = 0 : i64, tpu.core_type = #tpu.core_type<tc>, window_params = [{transform_indices = @transform_0, window_bounds = array<i64: 1, 8, 12, 24>}, {pipeline_mode = #tpu.pipeline_mode<synchronous>, transform_indices = @transform_1, window_bounds = array<i64: 5, 5, 24>}, {pipeline_mode = #tpu.pipeline_mode<synchronous>, transform_indices = @transform_2, window_bounds = array<i64: 1, 1, 24>}, {pipeline_mode = #tpu.pipeline_mode<synchronous>, transform_indices = @transform_3, window_bounds = array<i64: 1, 1, 24>}, {pipeline_mode = #tpu.pipeline_mode<synchronous>, transform_indices = @transform_4, window_bounds = array<i64: 24, 64>}, {pipeline_mode = #tpu.pipeline_mode<synchronous>, transform_indices = @transform_5, window_bounds = array<i64: 1, 64>}, {transform_indices = @transform_6, window_bounds = array<i64: 1, 4, 8, 64>}]} {
    %cst = arith.constant 0.000000e+00 : f32
    %0 = vector.broadcast %cst : f32 to vector<4x8x24xf32>
    %c0 = arith.constant 0 : index
    %c0_0 = arith.constant 0 : index
    %c0_1 = arith.constant 0 : index
    %c0_2 = arith.constant 0 : index
    %1 = vector.load %arg1[%c0, %c0_0, %c0_1, %c0_2] : memref<1x8x12x24xf32, #tpu.memory_space<vmem>>, vector<1x4x8x24xf32>
    %2 = vector.shape_cast %1 : vector<1x4x8x24xf32> to vector<4x8x24xf32>
    %c0_3 = arith.constant 0 : index
    %c0_4 = arith.constant 0 : index
    %c0_5 = arith.constant 0 : index
    %3 = vector.load %arg2[%c0_3, %c0_4, %c0_5] : memref<5x5x24xf32, #tpu.memory_space<vmem>>, vector<1x1x24xf32>
    %4 = vector.shape_cast %3 : vector<1x1x24xf32> to vector<24xf32>
    %5 = vector.shape_cast %4 : vector<24xf32> to vector<1x1x24xf32>
    %6 = vector.broadcast %5 : vector<1x1x24xf32> to vector<4x8x24xf32>
    %7 = arith.mulf %2, %6 : vector<4x8x24xf32>
    %8 = arith.addf %0, %7 : vector<4x8x24xf32>
    %c0_6 = arith.constant 0 : index
    %c0_7 = arith.constant 0 : index
    %c1 = arith.constant 1 : index
    %c0_8 = arith.constant 0 : index
    %9 = vector.load %arg1[%c0_6, %c0_7, %c1, %c0_8] : memref<1x8x12x24xf32, #tpu.memory_space<vmem>>, vector<1x4x8x24xf32>
    %10 = vector.shape_cast %9 : vector<1x4x8x24xf32> to vector<4x8x24xf32>
    %c0_9 = arith.constant 0 : index
    %c1_10 = arith.constant 1 : index
    %c0_11 = arith.constant 0 : index
    %11 = vector.load %arg2[%c0_9, %c1_10, %c0_11] : memref<5x5x24xf32, #tpu.memory_space<vmem>>, vector<1x1x24xf32>
    %12 = vector.shape_cast %11 : vector<1x1x24xf32> to vector<24xf32>
    %13 = vector.shape_cast %12 : vector<24xf32> to vector<1x1x24xf32>
    %14 = vector.broadcast %13 : vector<1x1x24xf32> to vector<4x8x24xf32>
    %15 = arith.mulf %10, %14 : vector<4x8x24xf32>
    %16 = arith.addf %8, %15 : vector<4x8x24xf32>
    %c0_12 = arith.constant 0 : index
    %c0_13 = arith.constant 0 : index
    %c2 = arith.constant 2 : index
    %c0_14 = arith.constant 0 : index
    %17 = vector.load %arg1[%c0_12, %c0_13, %c2, %c0_14] : memref<1x8x12x24xf32, #tpu.memory_space<vmem>>, vector<1x4x8x24xf32>
    %18 = vector.shape_cast %17 : vector<1x4x8x24xf32> to vector<4x8x24xf32>
    %c0_15 = arith.constant 0 : index
    %c2_16 = arith.constant 2 : index
    %c0_17 = arith.constant 0 : index
    %19 = vector.load %arg2[%c0_15, %c2_16, %c0_17] : memref<5x5x24xf32, #tpu.memory_space<vmem>>, vector<1x1x24xf32>
    %20 = vector.shape_cast %19 : vector<1x1x24xf32> to vector<24xf32>
    %21 = vector.shape_cast %20 : vector<24xf32> to vector<1x1x24xf32>
    %22 = vector.broadcast %21 : vector<1x1x24xf32> to vector<4x8x24xf32>
    %23 = arith.mulf %18, %22 : vector<4x8x24xf32>
    %24 = arith.addf %16, %23 : vector<4x8x24xf32>
    %c0_18 = arith.constant 0 : index
    %c0_19 = arith.constant 0 : index
    %c3 = arith.constant 3 : index
    %c0_20 = arith.constant 0 : index
    %25 = vector.load %arg1[%c0_18, %c0_19, %c3, %c0_20] : memref<1x8x12x24xf32, #tpu.memory_space<vmem>>, vector<1x4x8x24xf32>
    %26 = vector.shape_cast %25 : vector<1x4x8x24xf32> to vector<4x8x24xf32>
    %c0_21 = arith.constant 0 : index
    %c3_22 = arith.constant 3 : index
    %c0_23 = arith.constant 0 : index
    %27 = vector.load %arg2[%c0_21, %c3_22, %c0_23] : memref<5x5x24xf32, #tpu.memory_space<vmem>>, vector<1x1x24xf32>
    %28 = vector.shape_cast %27 : vector<1x1x24xf32> to vector<24xf32>
    %29 = vector.shape_cast %28 : vector<24xf32> to vector<1x1x24xf32>
    %30 = vector.broadcast %29 : vector<1x1x24xf32> to vector<4x8x24xf32>
    %31 = arith.mulf %26, %30 : vector<4x8x24xf32>
    %32 = arith.addf %24, %31 : vector<4x8x24xf32>
    %c0_24 = arith.constant 0 : index
    %c0_25 = arith.constant 0 : index
    %c4 = arith.constant 4 : index
    %c0_26 = arith.constant 0 : index
    %33 = vector.load %arg1[%c0_24, %c0_25, %c4, %c0_26] : memref<1x8x12x24xf32, #tpu.memory_space<vmem>>, vector<1x4x8x24xf32>
    %34 = vector.shape_cast %33 : vector<1x4x8x24xf32> to vector<4x8x24xf32>
    %c0_27 = arith.constant 0 : index
    %c4_28 = arith.constant 4 : index
    %c0_29 = arith.constant 0 : index
    %35 = vector.load %arg2[%c0_27, %c4_28, %c0_29] : memref<5x5x24xf32, #tpu.memory_space<vmem>>, vector<1x1x24xf32>
    %36 = vector.shape_cast %35 : vector<1x1x24xf32> to vector<24xf32>
    %37 = vector.shape_cast %36 : vector<24xf32> to vector<1x1x24xf32>
    %38 = vector.broadcast %37 : vector<1x1x24xf32> to vector<4x8x24xf32>
    %39 = arith.mulf %34, %38 : vector<4x8x24xf32>
    %40 = arith.addf %32, %39 : vector<4x8x24xf32>
    %c0_30 = arith.constant 0 : index
    %c1_31 = arith.constant 1 : index
    %c0_32 = arith.constant 0 : index
    %c0_33 = arith.constant 0 : index
    %41 = vector.load %arg1[%c0_30, %c1_31, %c0_32, %c0_33] : memref<1x8x12x24xf32, #tpu.memory_space<vmem>>, vector<1x4x8x24xf32>
    %42 = vector.shape_cast %41 : vector<1x4x8x24xf32> to vector<4x8x24xf32>
    %c1_34 = arith.constant 1 : index
    %c0_35 = arith.constant 0 : index
    %c0_36 = arith.constant 0 : index
    %43 = vector.load %arg2[%c1_34, %c0_35, %c0_36] : memref<5x5x24xf32, #tpu.memory_space<vmem>>, vector<1x1x24xf32>
    %44 = vector.shape_cast %43 : vector<1x1x24xf32> to vector<24xf32>
    %45 = vector.shape_cast %44 : vector<24xf32> to vector<1x1x24xf32>
    %46 = vector.broadcast %45 : vector<1x1x24xf32> to vector<4x8x24xf32>
    %47 = arith.mulf %42, %46 : vector<4x8x24xf32>
    %48 = arith.addf %40, %47 : vector<4x8x24xf32>
    %c0_37 = arith.constant 0 : index
    %c1_38 = arith.constant 1 : index
    %c1_39 = arith.constant 1 : index
    %c0_40 = arith.constant 0 : index
    %49 = vector.load %arg1[%c0_37, %c1_38, %c1_39, %c0_40] : memref<1x8x12x24xf32, #tpu.memory_space<vmem>>, vector<1x4x8x24xf32>
    %50 = vector.shape_cast %49 : vector<1x4x8x24xf32> to vector<4x8x24xf32>
    %c1_41 = arith.constant 1 : index
    %c1_42 = arith.constant 1 : index
    %c0_43 = arith.constant 0 : index
    %51 = vector.load %arg2[%c1_41, %c1_42, %c0_43] : memref<5x5x24xf32, #tpu.memory_space<vmem>>, vector<1x1x24xf32>
    %52 = vector.shape_cast %51 : vector<1x1x24xf32> to vector<24xf32>
    %53 = vector.shape_cast %52 : vector<24xf32> to vector<1x1x24xf32>
    %54 = vector.broadcast %53 : vector<1x1x24xf32> to vector<4x8x24xf32>
    %55 = arith.mulf %50, %54 : vector<4x8x24xf32>
    %56 = arith.addf %48, %55 : vector<4x8x24xf32>
    %c0_44 = arith.constant 0 : index
    %c1_45 = arith.constant 1 : index
    %c2_46 = arith.constant 2 : index
    %c0_47 = arith.constant 0 : index
    %57 = vector.load %arg1[%c0_44, %c1_45, %c2_46, %c0_47] : memref<1x8x12x24xf32, #tpu.memory_space<vmem>>, vector<1x4x8x24xf32>
    %58 = vector.shape_cast %57 : vector<1x4x8x24xf32> to vector<4x8x24xf32>
    %c1_48 = arith.constant 1 : index
    %c2_49 = arith.constant 2 : index
    %c0_50 = arith.constant 0 : index
    %59 = vector.load %arg2[%c1_48, %c2_49, %c0_50] : memref<5x5x24xf32, #tpu.memory_space<vmem>>, vector<1x1x24xf32>
    %60 = vector.shape_cast %59 : vector<1x1x24xf32> to vector<24xf32>
    %61 = vector.shape_cast %60 : vector<24xf32> to vector<1x1x24xf32>
    %62 = vector.broadcast %61 : vector<1x1x24xf32> to vector<4x8x24xf32>
    %63 = arith.mulf %58, %62 : vector<4x8x24xf32>
    %64 = arith.addf %56, %63 : vector<4x8x24xf32>
    %c0_51 = arith.constant 0 : index
    %c1_52 = arith.constant 1 : index
    %c3_53 = arith.constant 3 : index
    %c0_54 = arith.constant 0 : index
    %65 = vector.load %arg1[%c0_51, %c1_52, %c3_53, %c0_54] : memref<1x8x12x24xf32, #tpu.memory_space<vmem>>, vector<1x4x8x24xf32>
    %66 = vector.shape_cast %65 : vector<1x4x8x24xf32> to vector<4x8x24xf32>
    %c1_55 = arith.constant 1 : index
    %c3_56 = arith.constant 3 : index
    %c0_57 = arith.constant 0 : index
    %67 = vector.load %arg2[%c1_55, %c3_56, %c0_57] : memref<5x5x24xf32, #tpu.memory_space<vmem>>, vector<1x1x24xf32>
    %68 = vector.shape_cast %67 : vector<1x1x24xf32> to vector<24xf32>
    %69 = vector.shape_cast %68 : vector<24xf32> to vector<1x1x24xf32>
    %70 = vector.broadcast %69 : vector<1x1x24xf32> to vector<4x8x24xf32>
    %71 = arith.mulf %66, %70 : vector<4x8x24xf32>
    %72 = arith.addf %64, %71 : vector<4x8x24xf32>
    %c0_58 = arith.constant 0 : index
    %c1_59 = arith.constant 1 : index
    %c4_60 = arith.constant 4 : index
    %c0_61 = arith.constant 0 : index
    %73 = vector.load %arg1[%c0_58, %c1_59, %c4_60, %c0_61] : memref<1x8x12x24xf32, #tpu.memory_space<vmem>>, vector<1x4x8x24xf32>
    %74 = vector.shape_cast %73 : vector<1x4x8x24xf32> to vector<4x8x24xf32>
    %c1_62 = arith.constant 1 : index
    %c4_63 = arith.constant 4 : index
    %c0_64 = arith.constant 0 : index
    %75 = vector.load %arg2[%c1_62, %c4_63, %c0_64] : memref<5x5x24xf32, #tpu.memory_space<vmem>>, vector<1x1x24xf32>
    %76 = vector.shape_cast %75 : vector<1x1x24xf32> to vector<24xf32>
    %77 = vector.shape_cast %76 : vector<24xf32> to vector<1x1x24xf32>
    %78 = vector.broadcast %77 : vector<1x1x24xf32> to vector<4x8x24xf32>
    %79 = arith.mulf %74, %78 : vector<4x8x24xf32>
    %80 = arith.addf %72, %79 : vector<4x8x24xf32>
    %c0_65 = arith.constant 0 : index
    %c2_66 = arith.constant 2 : index
    %c0_67 = arith.constant 0 : index
    %c0_68 = arith.constant 0 : index
    %81 = vector.load %arg1[%c0_65, %c2_66, %c0_67, %c0_68] : memref<1x8x12x24xf32, #tpu.memory_space<vmem>>, vector<1x4x8x24xf32>
    %82 = vector.shape_cast %81 : vector<1x4x8x24xf32> to vector<4x8x24xf32>
    %c2_69 = arith.constant 2 : index
    %c0_70 = arith.constant 0 : index
    %c0_71 = arith.constant 0 : index
    %83 = vector.load %arg2[%c2_69, %c0_70, %c0_71] : memref<5x5x24xf32, #tpu.memory_space<vmem>>, vector<1x1x24xf32>
    %84 = vector.shape_cast %83 : vector<1x1x24xf32> to vector<24xf32>
    %85 = vector.shape_cast %84 : vector<24xf32> to vector<1x1x24xf32>
    %86 = vector.broadcast %85 : vector<1x1x24xf32> to vector<4x8x24xf32>
    %87 = arith.mulf %82, %86 : vector<4x8x24xf32>
    %88 = arith.addf %80, %87 : vector<4x8x24xf32>
    %c0_72 = arith.constant 0 : index
    %c2_73 = arith.constant 2 : index
    %c1_74 = arith.constant 1 : index
    %c0_75 = arith.constant 0 : index
    %89 = vector.load %arg1[%c0_72, %c2_73, %c1_74, %c0_75] : memref<1x8x12x24xf32, #tpu.memory_space<vmem>>, vector<1x4x8x24xf32>
    %90 = vector.shape_cast %89 : vector<1x4x8x24xf32> to vector<4x8x24xf32>
    %c2_76 = arith.constant 2 : index
    %c1_77 = arith.constant 1 : index
    %c0_78 = arith.constant 0 : index
    %91 = vector.load %arg2[%c2_76, %c1_77, %c0_78] : memref<5x5x24xf32, #tpu.memory_space<vmem>>, vector<1x1x24xf32>
    %92 = vector.shape_cast %91 : vector<1x1x24xf32> to vector<24xf32>
    %93 = vector.shape_cast %92 : vector<24xf32> to vector<1x1x24xf32>
    %94 = vector.broadcast %93 : vector<1x1x24xf32> to vector<4x8x24xf32>
    %95 = arith.mulf %90, %94 : vector<4x8x24xf32>
    %96 = arith.addf %88, %95 : vector<4x8x24xf32>
    %c0_79 = arith.constant 0 : index
    %c2_80 = arith.constant 2 : index
    %c2_81 = arith.constant 2 : index
    %c0_82 = arith.constant 0 : index
    %97 = vector.load %arg1[%c0_79, %c2_80, %c2_81, %c0_82] : memref<1x8x12x24xf32, #tpu.memory_space<vmem>>, vector<1x4x8x24xf32>
    %98 = vector.shape_cast %97 : vector<1x4x8x24xf32> to vector<4x8x24xf32>
    %c2_83 = arith.constant 2 : index
    %c2_84 = arith.constant 2 : index
    %c0_85 = arith.constant 0 : index
    %99 = vector.load %arg2[%c2_83, %c2_84, %c0_85] : memref<5x5x24xf32, #tpu.memory_space<vmem>>, vector<1x1x24xf32>
    %100 = vector.shape_cast %99 : vector<1x1x24xf32> to vector<24xf32>
    %101 = vector.shape_cast %100 : vector<24xf32> to vector<1x1x24xf32>
    %102 = vector.broadcast %101 : vector<1x1x24xf32> to vector<4x8x24xf32>
    %103 = arith.mulf %98, %102 : vector<4x8x24xf32>
    %104 = arith.addf %96, %103 : vector<4x8x24xf32>
    %c0_86 = arith.constant 0 : index
    %c2_87 = arith.constant 2 : index
    %c3_88 = arith.constant 3 : index
    %c0_89 = arith.constant 0 : index
    %105 = vector.load %arg1[%c0_86, %c2_87, %c3_88, %c0_89] : memref<1x8x12x24xf32, #tpu.memory_space<vmem>>, vector<1x4x8x24xf32>
    %106 = vector.shape_cast %105 : vector<1x4x8x24xf32> to vector<4x8x24xf32>
    %c2_90 = arith.constant 2 : index
    %c3_91 = arith.constant 3 : index
    %c0_92 = arith.constant 0 : index
    %107 = vector.load %arg2[%c2_90, %c3_91, %c0_92] : memref<5x5x24xf32, #tpu.memory_space<vmem>>, vector<1x1x24xf32>
    %108 = vector.shape_cast %107 : vector<1x1x24xf32> to vector<24xf32>
    %109 = vector.shape_cast %108 : vector<24xf32> to vector<1x1x24xf32>
    %110 = vector.broadcast %109 : vector<1x1x24xf32> to vector<4x8x24xf32>
    %111 = arith.mulf %106, %110 : vector<4x8x24xf32>
    %112 = arith.addf %104, %111 : vector<4x8x24xf32>
    %c0_93 = arith.constant 0 : index
    %c2_94 = arith.constant 2 : index
    %c4_95 = arith.constant 4 : index
    %c0_96 = arith.constant 0 : index
    %113 = vector.load %arg1[%c0_93, %c2_94, %c4_95, %c0_96] : memref<1x8x12x24xf32, #tpu.memory_space<vmem>>, vector<1x4x8x24xf32>
    %114 = vector.shape_cast %113 : vector<1x4x8x24xf32> to vector<4x8x24xf32>
    %c2_97 = arith.constant 2 : index
    %c4_98 = arith.constant 4 : index
    %c0_99 = arith.constant 0 : index
    %115 = vector.load %arg2[%c2_97, %c4_98, %c0_99] : memref<5x5x24xf32, #tpu.memory_space<vmem>>, vector<1x1x24xf32>
    %116 = vector.shape_cast %115 : vector<1x1x24xf32> to vector<24xf32>
    %117 = vector.shape_cast %116 : vector<24xf32> to vector<1x1x24xf32>
    %118 = vector.broadcast %117 : vector<1x1x24xf32> to vector<4x8x24xf32>
    %119 = arith.mulf %114, %118 : vector<4x8x24xf32>
    %120 = arith.addf %112, %119 : vector<4x8x24xf32>
    %c0_100 = arith.constant 0 : index
    %c3_101 = arith.constant 3 : index
    %c0_102 = arith.constant 0 : index
    %c0_103 = arith.constant 0 : index
    %121 = vector.load %arg1[%c0_100, %c3_101, %c0_102, %c0_103] : memref<1x8x12x24xf32, #tpu.memory_space<vmem>>, vector<1x4x8x24xf32>
    %122 = vector.shape_cast %121 : vector<1x4x8x24xf32> to vector<4x8x24xf32>
    %c3_104 = arith.constant 3 : index
    %c0_105 = arith.constant 0 : index
    %c0_106 = arith.constant 0 : index
    %123 = vector.load %arg2[%c3_104, %c0_105, %c0_106] : memref<5x5x24xf32, #tpu.memory_space<vmem>>, vector<1x1x24xf32>
    %124 = vector.shape_cast %123 : vector<1x1x24xf32> to vector<24xf32>
    %125 = vector.shape_cast %124 : vector<24xf32> to vector<1x1x24xf32>
    %126 = vector.broadcast %125 : vector<1x1x24xf32> to vector<4x8x24xf32>
    %127 = arith.mulf %122, %126 : vector<4x8x24xf32>
    %128 = arith.addf %120, %127 : vector<4x8x24xf32>
    %c0_107 = arith.constant 0 : index
    %c3_108 = arith.constant 3 : index
    %c1_109 = arith.constant 1 : index
    %c0_110 = arith.constant 0 : index
    %129 = vector.load %arg1[%c0_107, %c3_108, %c1_109, %c0_110] : memref<1x8x12x24xf32, #tpu.memory_space<vmem>>, vector<1x4x8x24xf32>
    %130 = vector.shape_cast %129 : vector<1x4x8x24xf32> to vector<4x8x24xf32>
    %c3_111 = arith.constant 3 : index
    %c1_112 = arith.constant 1 : index
    %c0_113 = arith.constant 0 : index
    %131 = vector.load %arg2[%c3_111, %c1_112, %c0_113] : memref<5x5x24xf32, #tpu.memory_space<vmem>>, vector<1x1x24xf32>
    %132 = vector.shape_cast %131 : vector<1x1x24xf32> to vector<24xf32>
    %133 = vector.shape_cast %132 : vector<24xf32> to vector<1x1x24xf32>
    %134 = vector.broadcast %133 : vector<1x1x24xf32> to vector<4x8x24xf32>
    %135 = arith.mulf %130, %134 : vector<4x8x24xf32>
    %136 = arith.addf %128, %135 : vector<4x8x24xf32>
    %c0_114 = arith.constant 0 : index
    %c3_115 = arith.constant 3 : index
    %c2_116 = arith.constant 2 : index
    %c0_117 = arith.constant 0 : index
    %137 = vector.load %arg1[%c0_114, %c3_115, %c2_116, %c0_117] : memref<1x8x12x24xf32, #tpu.memory_space<vmem>>, vector<1x4x8x24xf32>
    %138 = vector.shape_cast %137 : vector<1x4x8x24xf32> to vector<4x8x24xf32>
    %c3_118 = arith.constant 3 : index
    %c2_119 = arith.constant 2 : index
    %c0_120 = arith.constant 0 : index
    %139 = vector.load %arg2[%c3_118, %c2_119, %c0_120] : memref<5x5x24xf32, #tpu.memory_space<vmem>>, vector<1x1x24xf32>
    %140 = vector.shape_cast %139 : vector<1x1x24xf32> to vector<24xf32>
    %141 = vector.shape_cast %140 : vector<24xf32> to vector<1x1x24xf32>
    %142 = vector.broadcast %141 : vector<1x1x24xf32> to vector<4x8x24xf32>
    %143 = arith.mulf %138, %142 : vector<4x8x24xf32>
    %144 = arith.addf %136, %143 : vector<4x8x24xf32>
    %c0_121 = arith.constant 0 : index
    %c3_122 = arith.constant 3 : index
    %c3_123 = arith.constant 3 : index
    %c0_124 = arith.constant 0 : index
    %145 = vector.load %arg1[%c0_121, %c3_122, %c3_123, %c0_124] : memref<1x8x12x24xf32, #tpu.memory_space<vmem>>, vector<1x4x8x24xf32>
    %146 = vector.shape_cast %145 : vector<1x4x8x24xf32> to vector<4x8x24xf32>
    %c3_125 = arith.constant 3 : index
    %c3_126 = arith.constant 3 : index
    %c0_127 = arith.constant 0 : index
    %147 = vector.load %arg2[%c3_125, %c3_126, %c0_127] : memref<5x5x24xf32, #tpu.memory_space<vmem>>, vector<1x1x24xf32>
    %148 = vector.shape_cast %147 : vector<1x1x24xf32> to vector<24xf32>
    %149 = vector.shape_cast %148 : vector<24xf32> to vector<1x1x24xf32>
    %150 = vector.broadcast %149 : vector<1x1x24xf32> to vector<4x8x24xf32>
    %151 = arith.mulf %146, %150 : vector<4x8x24xf32>
    %152 = arith.addf %144, %151 : vector<4x8x24xf32>
    %c0_128 = arith.constant 0 : index
    %c3_129 = arith.constant 3 : index
    %c4_130 = arith.constant 4 : index
    %c0_131 = arith.constant 0 : index
    %153 = vector.load %arg1[%c0_128, %c3_129, %c4_130, %c0_131] : memref<1x8x12x24xf32, #tpu.memory_space<vmem>>, vector<1x4x8x24xf32>
    %154 = vector.shape_cast %153 : vector<1x4x8x24xf32> to vector<4x8x24xf32>
    %c3_132 = arith.constant 3 : index
    %c4_133 = arith.constant 4 : index
    %c0_134 = arith.constant 0 : index
    %155 = vector.load %arg2[%c3_132, %c4_133, %c0_134] : memref<5x5x24xf32, #tpu.memory_space<vmem>>, vector<1x1x24xf32>
    %156 = vector.shape_cast %155 : vector<1x1x24xf32> to vector<24xf32>
    %157 = vector.shape_cast %156 : vector<24xf32> to vector<1x1x24xf32>
    %158 = vector.broadcast %157 : vector<1x1x24xf32> to vector<4x8x24xf32>
    %159 = arith.mulf %154, %158 : vector<4x8x24xf32>
    %160 = arith.addf %152, %159 : vector<4x8x24xf32>
    %c0_135 = arith.constant 0 : index
    %c4_136 = arith.constant 4 : index
    %c0_137 = arith.constant 0 : index
    %c0_138 = arith.constant 0 : index
    %161 = vector.load %arg1[%c0_135, %c4_136, %c0_137, %c0_138] : memref<1x8x12x24xf32, #tpu.memory_space<vmem>>, vector<1x4x8x24xf32>
    %162 = vector.shape_cast %161 : vector<1x4x8x24xf32> to vector<4x8x24xf32>
    %c4_139 = arith.constant 4 : index
    %c0_140 = arith.constant 0 : index
    %c0_141 = arith.constant 0 : index
    %163 = vector.load %arg2[%c4_139, %c0_140, %c0_141] : memref<5x5x24xf32, #tpu.memory_space<vmem>>, vector<1x1x24xf32>
    %164 = vector.shape_cast %163 : vector<1x1x24xf32> to vector<24xf32>
    %165 = vector.shape_cast %164 : vector<24xf32> to vector<1x1x24xf32>
    %166 = vector.broadcast %165 : vector<1x1x24xf32> to vector<4x8x24xf32>
    %167 = arith.mulf %162, %166 : vector<4x8x24xf32>
    %168 = arith.addf %160, %167 : vector<4x8x24xf32>
    %c0_142 = arith.constant 0 : index
    %c4_143 = arith.constant 4 : index
    %c1_144 = arith.constant 1 : index
    %c0_145 = arith.constant 0 : index
    %169 = vector.load %arg1[%c0_142, %c4_143, %c1_144, %c0_145] : memref<1x8x12x24xf32, #tpu.memory_space<vmem>>, vector<1x4x8x24xf32>
    %170 = vector.shape_cast %169 : vector<1x4x8x24xf32> to vector<4x8x24xf32>
    %c4_146 = arith.constant 4 : index
    %c1_147 = arith.constant 1 : index
    %c0_148 = arith.constant 0 : index
    %171 = vector.load %arg2[%c4_146, %c1_147, %c0_148] : memref<5x5x24xf32, #tpu.memory_space<vmem>>, vector<1x1x24xf32>
    %172 = vector.shape_cast %171 : vector<1x1x24xf32> to vector<24xf32>
    %173 = vector.shape_cast %172 : vector<24xf32> to vector<1x1x24xf32>
    %174 = vector.broadcast %173 : vector<1x1x24xf32> to vector<4x8x24xf32>
    %175 = arith.mulf %170, %174 : vector<4x8x24xf32>
    %176 = arith.addf %168, %175 : vector<4x8x24xf32>
    %c0_149 = arith.constant 0 : index
    %c4_150 = arith.constant 4 : index
    %c2_151 = arith.constant 2 : index
    %c0_152 = arith.constant 0 : index
    %177 = vector.load %arg1[%c0_149, %c4_150, %c2_151, %c0_152] : memref<1x8x12x24xf32, #tpu.memory_space<vmem>>, vector<1x4x8x24xf32>
    %178 = vector.shape_cast %177 : vector<1x4x8x24xf32> to vector<4x8x24xf32>
    %c4_153 = arith.constant 4 : index
    %c2_154 = arith.constant 2 : index
    %c0_155 = arith.constant 0 : index
    %179 = vector.load %arg2[%c4_153, %c2_154, %c0_155] : memref<5x5x24xf32, #tpu.memory_space<vmem>>, vector<1x1x24xf32>
    %180 = vector.shape_cast %179 : vector<1x1x24xf32> to vector<24xf32>
    %181 = vector.shape_cast %180 : vector<24xf32> to vector<1x1x24xf32>
    %182 = vector.broadcast %181 : vector<1x1x24xf32> to vector<4x8x24xf32>
    %183 = arith.mulf %178, %182 : vector<4x8x24xf32>
    %184 = arith.addf %176, %183 : vector<4x8x24xf32>
    %c0_156 = arith.constant 0 : index
    %c4_157 = arith.constant 4 : index
    %c3_158 = arith.constant 3 : index
    %c0_159 = arith.constant 0 : index
    %185 = vector.load %arg1[%c0_156, %c4_157, %c3_158, %c0_159] : memref<1x8x12x24xf32, #tpu.memory_space<vmem>>, vector<1x4x8x24xf32>
    %186 = vector.shape_cast %185 : vector<1x4x8x24xf32> to vector<4x8x24xf32>
    %c4_160 = arith.constant 4 : index
    %c3_161 = arith.constant 3 : index
    %c0_162 = arith.constant 0 : index
    %187 = vector.load %arg2[%c4_160, %c3_161, %c0_162] : memref<5x5x24xf32, #tpu.memory_space<vmem>>, vector<1x1x24xf32>
    %188 = vector.shape_cast %187 : vector<1x1x24xf32> to vector<24xf32>
    %189 = vector.shape_cast %188 : vector<24xf32> to vector<1x1x24xf32>
    %190 = vector.broadcast %189 : vector<1x1x24xf32> to vector<4x8x24xf32>
    %191 = arith.mulf %186, %190 : vector<4x8x24xf32>
    %192 = arith.addf %184, %191 : vector<4x8x24xf32>
    %c0_163 = arith.constant 0 : index
    %c4_164 = arith.constant 4 : index
    %c4_165 = arith.constant 4 : index
    %c0_166 = arith.constant 0 : index
    %193 = vector.load %arg1[%c0_163, %c4_164, %c4_165, %c0_166] : memref<1x8x12x24xf32, #tpu.memory_space<vmem>>, vector<1x4x8x24xf32>
    %194 = vector.shape_cast %193 : vector<1x4x8x24xf32> to vector<4x8x24xf32>
    %c4_167 = arith.constant 4 : index
    %c4_168 = arith.constant 4 : index
    %c0_169 = arith.constant 0 : index
    %195 = vector.load %arg2[%c4_167, %c4_168, %c0_169] : memref<5x5x24xf32, #tpu.memory_space<vmem>>, vector<1x1x24xf32>
    %196 = vector.shape_cast %195 : vector<1x1x24xf32> to vector<24xf32>
    %197 = vector.shape_cast %196 : vector<24xf32> to vector<1x1x24xf32>
    %198 = vector.broadcast %197 : vector<1x1x24xf32> to vector<4x8x24xf32>
    %199 = arith.mulf %194, %198 : vector<4x8x24xf32>
    %200 = arith.addf %192, %199 : vector<4x8x24xf32>
    %c0_170 = arith.constant 0 : index
    %c0_171 = arith.constant 0 : index
    %c0_172 = arith.constant 0 : index
    %201 = vector.load %arg3[%c0_170, %c0_171, %c0_172] : memref<1x1x24xf32, #tpu.memory_space<vmem>>, vector<1x1x24xf32>
    %202 = vector.broadcast %201 : vector<1x1x24xf32> to vector<4x8x24xf32>
    %203 = arith.mulf %200, %202 : vector<4x8x24xf32>
    %c0_173 = arith.constant 0 : index
    %c0_174 = arith.constant 0 : index
    %c0_175 = arith.constant 0 : index
    %204 = vector.load %arg4[%c0_173, %c0_174, %c0_175] : memref<1x1x24xf32, #tpu.memory_space<vmem>>, vector<1x1x24xf32>
    %205 = vector.broadcast %204 : vector<1x1x24xf32> to vector<4x8x24xf32>
    %206 = arith.addf %203, %205 : vector<4x8x24xf32>
    %207 = vector.shape_cast %206 : vector<4x8x24xf32> to vector<32x24xf32>
    %208 = arith.truncf %207 : vector<32x24xf32> to vector<32x24xbf16>
    %c0_176 = arith.constant 0 : index
    %c0_177 = arith.constant 0 : index
    %209 = vector.load %arg5[%c0_176, %c0_177] : memref<24x64xbf16, #tpu.memory_space<vmem>>, vector<24x64xbf16>
    %cst_178 = arith.constant dense<0.000000e+00> : vector<32x64xf32>
    %210 = tpu.matmul %208, %209, %cst_178 {dimension_numbers = #tpu.dot_dimension_numbers<[1], [0], [0], [1], [0, 0, 1, 1], [], []>} : vector<32x24xbf16>, vector<24x64xbf16>, vector<32x64xf32> -> vector<32x64xf32>
    %c0_179 = arith.constant 0 : index
    %c0_180 = arith.constant 0 : index
    %211 = vector.load %arg6[%c0_179, %c0_180] : memref<1x64xf32, #tpu.memory_space<vmem>>, vector<1x64xf32>
    %212 = vector.broadcast %211 : vector<1x64xf32> to vector<32x64xf32>
    %213 = arith.addf %210, %212 : vector<32x64xf32>
    %cst_181 = arith.constant 0.000000e+00 : f32
    %214 = vector.broadcast %cst_181 : f32 to vector<32x64xf32>
    %215 = arith.maximumf %213, %214 : vector<32x64xf32>
    %216 = vector.shape_cast %215 : vector<32x64xf32> to vector<4x8x64xf32>
    %c0_182 = arith.constant 0 : index
    %c0_183 = arith.constant 0 : index
    %c0_184 = arith.constant 0 : index
    %c0_185 = arith.constant 0 : index
    %217 = vector.load %arg7[%c0_182, %c0_183, %c0_184, %c0_185] : memref<1x4x8x64xf32, #tpu.memory_space<vmem>>, vector<1x4x8x64xf32>
    %218 = vector.shape_cast %217 : vector<1x4x8x64xf32> to vector<4x8x64xf32>
    %219 = vector.shape_cast %216 : vector<4x8x64xf32> to vector<1x4x8x64xf32>
    tpu.vector_store %arg7[%c0_182, %c0_183, %c0_184, %c0_185], %219 {strides = array<i32>} : memref<1x4x8x64xf32, #tpu.memory_space<vmem>>, vector<1x4x8x64xf32>,
    return
  }
  func.func @transform_0(%arg0: i32) -> (i32, i32, i32, i32) {
    %c0_i32 = arith.constant 0 : i32
    %c0_i32_0 = arith.constant 0 : i32
    %c0_i32_1 = arith.constant 0 : i32
    %c0_i32_2 = arith.constant 0 : i32
    return %arg0, %c0_i32, %c0_i32_0, %c0_i32_1 : i32, i32, i32, i32
  }
  func.func @transform_1(%arg0: i32) -> (i32, i32, i32) {
    %c0_i32 = arith.constant 0 : i32
    %c0_i32_0 = arith.constant 0 : i32
    %c0_i32_1 = arith.constant 0 : i32
    %c0_i32_2 = arith.constant 0 : i32
    return %c0_i32, %c0_i32_0, %c0_i32_1 : i32, i32, i32
  }
  func.func @transform_2(%arg0: i32) -> (i32, i32, i32) {
    %c0_i32 = arith.constant 0 : i32
    %c0_i32_0 = arith.constant 0 : i32
    %c0_i32_1 = arith.constant 0 : i32
    %c0_i32_2 = arith.constant 0 : i32
    return %c0_i32, %c0_i32_0, %c0_i32_1 : i32, i32, i32
  }
  func.func @transform_3(%arg0: i32) -> (i32, i32, i32) {
    %c0_i32 = arith.constant 0 : i32
    %c0_i32_0 = arith.constant 0 : i32
    %c0_i32_1 = arith.constant 0 : i32
    %c0_i32_2 = arith.constant 0 : i32
    return %c0_i32, %c0_i32_0, %c0_i32_1 : i32, i32, i32
  }
  func.func @transform_4(%arg0: i32) -> (i32, i32) {
    %c0_i32 = arith.constant 0 : i32
    %c0_i32_0 = arith.constant 0 : i32
    %c0_i32_1 = arith.constant 0 : i32
    return %c0_i32, %c0_i32_0 : i32, i32
  }
  func.func @transform_5(%arg0: i32) -> (i32, i32) {
    %c0_i32 = arith.constant 0 : i32
    %c0_i32_0 = arith.constant 0 : i32
    %c0_i32_1 = arith.constant 0 : i32
    return %c0_i32, %c0_i32_0 : i32, i32
  }
  func.func @transform_6(%arg0: i32) -> (i32, i32, i32, i32) {
    %c0_i32 = arith.constant 0 : i32
    %c0_i32_0 = arith.constant 0 : i32
    %c0_i32_1 = arith.constant 0 : i32
    %c0_i32_2 = arith.constant 0 : i32
    return %arg0, %c0_i32, %c0_i32_0, %c0_i32_1 : i32, i32, i32, i32
  }
}

</mosaic_0001>

<llo_original>
// kernel: tpu_custom_call.1
$region0: #{tpu_custom_call.1}
  #allocation0 [shape = 'u32[]', space=smem, size = 0x4, offset = 0x4, fixed_abs, tag = 'smem constant byte address 0x4 - core index']
  #allocation1 [shape = 'u32[144,128]{1,0:T(1,128)}', space=vmem, size = 0x12000, scoped, tag = 'internal scratch']
  %s0 = inlined_call_operand.vmem [shape: f32[1,8,12,24], index: 0, kind: input, shape index: {}]
  %s1 = inlined_call_operand.vmem [shape: f32[5,5,24], index: 1, kind: input, shape index: {}]
  %s2 = inlined_call_operand.vmem [shape: f32[1,1,24], index: 2, kind: input, shape index: {}]
  %s3 = inlined_call_operand.vmem [shape: f32[1,1,24], index: 3, kind: input, shape index: {}]
  %s4 = inlined_call_operand.vmem [shape: bf16[24,64], index: 4, kind: input, shape index: {}]
  %s5 = inlined_call_operand.vmem [shape: f32[1,64], index: 5, kind: input, shape index: {}]
  %s6 = inlined_call_operand.hbm [shape: f32[1,4,8,64], index: 6, kind: output, shape index: {}]
  %s7 = sld [smem:[#allocation0]]
  $region34: #{tpu_custom_call.1} parent=0
    _
  %s9 = ssub.s32 1, %s7
  %s10 = scalar_select 0, %s9, %s7
  $region1: #{tpu_custom_call.1} parent=0
    #allocation2 [shape = 'u8[16384]{0}', space=vmem, size = 0x4000, scoped, tag = 'output window, operand 0, single buffered']
    #allocation3 [shape = 's32[1]{0}', space=sflag, size = 0x4, scoped, tag = 'scoped memory for tpu_custom_call.1']
    %11 = vsyncpa [#allocation3], 0
    // Predicated region
    $region2: #{tpu_custom_call.1} parent=1 // pred_check
      _
    $region3: #{tpu_custom_call.1} parent=1 // pred_check_branch
      %13 = sbr.rel (0) target = $region5
    $region4: #{tpu_custom_call.1} parent=1 // pred_region
      _
    $region5: #{tpu_custom_call.1} parent=1 // pred_fallthru
      _
    // Predicated region
    $region6: #{tpu_custom_call.1} parent=1 // pred_check
      _
    $region7: #{tpu_custom_call.1} parent=1 // pred_check_branch
      %15 = sbr.rel (0) target = $region9
    $region8: #{tpu_custom_call.1} parent=1 // pred_region
      _
    $region9: #{tpu_custom_call.1} parent=1 // pred_fallthru
      _
    // Predicated region
    $region10: #{tpu_custom_call.1} parent=1 // pred_check
      _
    $region11: #{tpu_custom_call.1} parent=1 // pred_check_branch
      %17 = sbr.rel (0) target = $region13
    $region12: #{tpu_custom_call.1} parent=1 // pred_region
      _
    $region13: #{tpu_custom_call.1} parent=1 // pred_fallthru
      _
    // Predicated region
    $region14: #{tpu_custom_call.1} parent=1 // pred_check
      _
    $region15: #{tpu_custom_call.1} parent=1 // pred_check_branch
      %19 = sbr.rel (0) target = $region17
    $region16: #{tpu_custom_call.1} parent=1 // pred_region
      _
    $region17: #{tpu_custom_call.1} parent=1 // pred_fallthru
      _
    // Predicated region
    $region18: #{tpu_custom_call.1} parent=1 // pred_check
      _
    $region19: #{tpu_custom_call.1} parent=1 // pred_check_branch
      %21 = sbr.rel (0) target = $region21
    $region20: #{tpu_custom_call.1} parent=1 // pred_region
      _
    $region21: #{tpu_custom_call.1} parent=1 // pred_fallthru
      _
    // Predicated region
    $region22: #{tpu_custom_call.1} parent=1 // pred_check
      _
    $region23: #{tpu_custom_call.1} parent=1 // pred_check_branch
      %23 = sbr.rel (0) target = $region25
    $region24: #{tpu_custom_call.1} parent=1 // pred_region
      _
    $region25: #{tpu_custom_call.1} parent=1 // pred_fallthru
      _
    %v25 = vld [vmem:[%s0] sm:$0xff]
    %v26 = vld [vmem:[%s0 + $0x10] sm:$0xff]
    %v27 = vld [vmem:[%s0 + $0x20] sm:$0xff]
    %v28 = vld [vmem:[%s0 + $0x30] sm:$0xff]
    %v29 = vld [vmem:[%s1] sm:$0x1]
    %v30 = vlaneseq
    %v31 = vshrl.u32 %v30, 7
    %v32 = vsub.s32 0, %v31
    %v33 = vrot.slane %v29, %v32
    %v34 = vmul.f32 %v25, %v33
    %v35 = vmul.f32 %v26, %v33
    %v36 = vmul.f32 %v27, %v33
    %v37 = vmul.f32 %v28, %v33
    %v38 = vadd.f32 %v34, 0.0
    %v39 = vadd.f32 %v35, 0.0
    %v40 = vadd.f32 %v36, 0.0
    %v41 = vadd.f32 %v37, 0.0
    %v42 = vld [vmem:[%s0 + $0x1] sm:$0xff]
    %v43 = vld [vmem:[%s0 + $0x11] sm:$0xff]
    %v44 = vld [vmem:[%s0 + $0x21] sm:$0xff]
    %v45 = vld [vmem:[%s0 + $0x31] sm:$0xff]
    %v46 = vld [vmem:[%s1 + $0x1] sm:$0x1]
    %v47 = vlaneseq
    %v48 = vshrl.u32 %v47, 7
    %v49 = vsub.s32 0, %v48
    %v50 = vrot.slane %v46, %v49
    %v51 = vmul.f32 %v42, %v50
    %v52 = vmul.f32 %v43, %v50
    %v53 = vmul.f32 %v44, %v50
    %v54 = vmul.f32 %v45, %v50
    %v55 = vadd.f32 %v38, %v51
    %v56 = vadd.f32 %v39, %v52
    %v57 = vadd.f32 %v40, %v53
    %v58 = vadd.f32 %v41, %v54
    %v59 = vld [vmem:[%s0 + $0x2] sm:$0xff]
    %v60 = vld [vmem:[%s0 + $0x12] sm:$0xff]
    %v61 = vld [vmem:[%s0 + $0x22] sm:$0xff]
    %v62 = vld [vmem:[%s0 + $0x32] sm:$0xff]
    %v63 = vld [vmem:[%s1 + $0x2] sm:$0x1]
    %v64 = vlaneseq
    %v65 = vshrl.u32 %v64, 7
    %v66 = vsub.s32 0, %v65
    %v67 = vrot.slane %v63, %v66
    %v68 = vmul.f32 %v59, %v67
    %v69 = vmul.f32 %v60, %v67
    %v70 = vmul.f32 %v61, %v67
    %v71 = vmul.f32 %v62, %v67
    %v72 = vadd.f32 %v55, %v68
    %v73 = vadd.f32 %v56, %v69
    %v74 = vadd.f32 %v57, %v70
    %v75 = vadd.f32 %v58, %v71
    %v76 = vld [vmem:[%s0 + $0x3] sm:$0xff]
    %v77 = vld [vmem:[%s0 + $0x13] sm:$0xff]
    %v78 = vld [vmem:[%s0 + $0x23] sm:$0xff]
    %v79 = vld [vmem:[%s0 + $0x33] sm:$0xff]
    %v80 = vld [vmem:[%s1 + $0x3] sm:$0x1]
    %v81 = vlaneseq
    %v82 = vshrl.u32 %v81, 7
    %v83 = vsub.s32 0, %v82
    %v84 = vrot.slane %v80, %v83
    %v85 = vmul.f32 %v76, %v84
    %v86 = vmul.f32 %v77, %v84
    %v87 = vmul.f32 %v78, %v84
    %v88 = vmul.f32 %v79, %v84
    %v89 = vadd.f32 %v72, %v85
    %v90 = vadd.f32 %v73, %v86
    %v91 = vadd.f32 %v74, %v87
    %v92 = vadd.f32 %v75, %v88
    %v93 = vld [vmem:[%s0 + $0x4] sm:$0xff]
    %v94 = vld [vmem:[%s0 + $0x14] sm:$0xff]
    %v95 = vld [vmem:[%s0 + $0x24] sm:$0xff]
    %v96 = vld [vmem:[%s0 + $0x34] sm:$0xff]
    %v97 = vld [vmem:[%s1 + $0x4] sm:$0x1]
    %v98 = vlaneseq
    %v99 = vshrl.u32 %v98, 7
    %v100 = vsub.s32 0, %v99
    %v101 = vrot.slane %v97, %v100
    %v102 = vmul.f32 %v93, %v101
    %v103 = vmul.f32 %v94, %v101
    %v104 = vmul.f32 %v95, %v101
    %v105 = vmul.f32 %v96, %v101
    %v106 = vadd.f32 %v89, %v102
    %v107 = vadd.f32 %v90, %v103
    %v108 = vadd.f32 %v91, %v104
    %v109 = vadd.f32 %v92, %v105
    %s110 = scalar_lea.vmem %s0, 16
    %v111 = vld [vmem:[%s110] sm:$0xff]
    %v112 = vld [vmem:[%s110 + $0x10] sm:$0xff]
    %v113 = vld [vmem:[%s110 + $0x20] sm:$0xff]
    %v114 = vld [vmem:[%s110 + $0x30] sm:$0xff]
    %s115 = scalar_lea.vmem %s1, 8
    %v116 = vld [vmem:[%s115] sm:$0x1]
    %v117 = vlaneseq
    %v118 = vshrl.u32 %v117, 7
    %v119 = vsub.s32 0, %v118
    %v120 = vrot.slane %v116, %v119
    %v121 = vmul.f32 %v111, %v120
    %v122 = vmul.f32 %v112, %v120
    %v123 = vmul.f32 %v113, %v120
    %v124 = vmul.f32 %v114, %v120
    %v125 = vadd.f32 %v106, %v121
    %v126 = vadd.f32 %v107, %v122
    %v127 = vadd.f32 %v108, %v123
    %v128 = vadd.f32 %v109, %v124
    %v129 = vld [vmem:[%s110 + $0x1] sm:$0xff]
    %v130 = vld [vmem:[%s110 + $0x11] sm:$0xff]
    %v131 = vld [vmem:[%s110 + $0x21] sm:$0xff]
    %v132 = vld [vmem:[%s110 + $0x31] sm:$0xff]
    %v133 = vld [vmem:[%s115 + $0x1] sm:$0x1]
    %v134 = vlaneseq
    %v135 = vshrl.u32 %v134, 7
    %v136 = vsub.s32 0, %v135
    %v137 = vrot.slane %v133, %v136
    %v138 = vmul.f32 %v129, %v137
    %v139 = vmul.f32 %v130, %v137
    %v140 = vmul.f32 %v131, %v137
    %v141 = vmul.f32 %v132, %v137
    %v142 = vadd.f32 %v125, %v138
    %v143 = vadd.f32 %v126, %v139
    %v144 = vadd.f32 %v127, %v140
    %v145 = vadd.f32 %v128, %v141
    %v146 = vld [vmem:[%s110 + $0x2] sm:$0xff]
    %v147 = vld [vmem:[%s110 + $0x12] sm:$0xff]
    %v148 = vld [vmem:[%s110 + $0x22] sm:$0xff]
    %v149 = vld [vmem:[%s110 + $0x32] sm:$0xff]
    %v150 = vld [vmem:[%s115 + $0x2] sm:$0x1]
    %v151 = vlaneseq
    %v152 = vshrl.u32 %v151, 7
    %v153 = vsub.s32 0, %v152
    %v154 = vrot.slane %v150, %v153
    %v155 = vmul.f32 %v146, %v154
    %v156 = vmul.f32 %v147, %v154
    %v157 = vmul.f32 %v148, %v154
    %v158 = vmul.f32 %v149, %v154
    %v159 = vadd.f32 %v142, %v155
    %v160 = vadd.f32 %v143, %v156
    %v161 = vadd.f32 %v144, %v157
    %v162 = vadd.f32 %v145, %v158
    %v163 = vld [vmem:[%s110 + $0x3] sm:$0xff]
    %v164 = vld [vmem:[%s110 + $0x13] sm:$0xff]
    %v165 = vld [vmem:[%s110 + $0x23] sm:$0xff]
    %v166 = vld [vmem:[%s110 + $0x33] sm:$0xff]
    %v167 = vld [vmem:[%s115 + $0x3] sm:$0x1]
    %v168 = vlaneseq
    %v169 = vshrl.u32 %v168, 7
    %v170 = vsub.s32 0, %v169
    %v171 = vrot.slane %v167, %v170
    %v172 = vmul.f32 %v163, %v171
    %v173 = vmul.f32 %v164, %v171
    %v174 = vmul.f32 %v165, %v171
    %v175 = vmul.f32 %v166, %v171
    %v176 = vadd.f32 %v159, %v172
    %v177 = vadd.f32 %v160, %v173
    %v178 = vadd.f32 %v161, %v174
    %v179 = vadd.f32 %v162, %v175
    %v180 = vld [vmem:[%s110 + $0x4] sm:$0xff]
    %v181 = vld [vmem:[%s110 + $0x14] sm:$0xff]
    %v182 = vld [vmem:[%s110 + $0x24] sm:$0xff]
    %v183 = vld [vmem:[%s110 + $0x34] sm:$0xff]
    %v184 = vld [vmem:[%s115 + $0x4] sm:$0x1]
    %v185 = vlaneseq
    %v186 = vshrl.u32 %v185, 7
    %v187 = vsub.s32 0, %v186
    %v188 = vrot.slane %v184, %v187
    %v189 = vmul.f32 %v180, %v188
    %v190 = vmul.f32 %v181, %v188
    %v191 = vmul.f32 %v182, %v188
    %v192 = vmul.f32 %v183, %v188
    %v193 = vadd.f32 %v176, %v189
    %v194 = vadd.f32 %v177, %v190
    %v195 = vadd.f32 %v178, %v191
    %v196 = vadd.f32 %v179, %v192
    %s197 = scalar_lea.vmem %s0, 32
    %v198 = vld [vmem:[%s197] sm:$0xff]
    %v199 = vld [vmem:[%s197 + $0x10] sm:$0xff]
    %v200 = vld [vmem:[%s197 + $0x20] sm:$0xff]
    %v201 = vld [vmem:[%s197 + $0x30] sm:$0xff]
    %s202 = scalar_lea.vmem %s1, 16
    %v203 = vld [vmem:[%s202] sm:$0x1]
    %v204 = vlaneseq
    %v205 = vshrl.u32 %v204, 7
    %v206 = vsub.s32 0, %v205
    %v207 = vrot.slane %v203, %v206
    %v208 = vmul.f32 %v198, %v207
    %v209 = vmul.f32 %v199, %v207
    %v210 = vmul.f32 %v200, %v207
    %v211 = vmul.f32 %v201, %v207
    %v212 = vadd.f32 %v193, %v208
    %v213 = vadd.f32 %v194, %v209
    %v214 = vadd.f32 %v195, %v210
    %v215 = vadd.f32 %v196, %v211
    %v216 = vld [vmem:[%s197 + $0x1] sm:$0xff]
    %v217 = vld [vmem:[%s197 + $0x11] sm:$0xff]
    %v218 = vld [vmem:[%s197 + $0x21] sm:$0xff]
    %v219 = vld [vmem:[%s197 + $0x31] sm:$0xff]
    %v220 = vld [vmem:[%s202 + $0x1] sm:$0x1]
    %v221 = vlaneseq
    %v222 = vshrl.u32 %v221, 7
    %v223 = vsub.s32 0, %v222
    %v224 = vrot.slane %v220, %v223
    %v225 = vmul.f32 %v216, %v224
    %v226 = vmul.f32 %v217, %v224
    %v227 = vmul.f32 %v218, %v224
    %v228 = vmul.f32 %v219, %v224
    %v229 = vadd.f32 %v212, %v225
    %v230 = vadd.f32 %v213, %v226
    %v231 = vadd.f32 %v214, %v227
    %v232 = vadd.f32 %v215, %v228
    %v233 = vld [vmem:[%s197 + $0x2] sm:$0xff]
    %v234 = vld [vmem:[%s197 + $0x12] sm:$0xff]
    %v235 = vld [vmem:[%s197 + $0x22] sm:$0xff]
    %v236 = vld [vmem:[%s197 + $0x32] sm:$0xff]
    %v237 = vld [vmem:[%s202 + $0x2] sm:$0x1]
    %v238 = vlaneseq
    %v239 = vshrl.u32 %v238, 7
    %v240 = vsub.s32 0, %v239
    %v241 = vrot.slane %v237, %v240
    %v242 = vmul.f32 %v233, %v241
    %v243 = vmul.f32 %v234, %v241
    %v244 = vmul.f32 %v235, %v241
    %v245 = vmul.f32 %v236, %v241
    %v246 = vadd.f32 %v229, %v242
    %v247 = vadd.f32 %v230, %v243
    %v248 = vadd.f32 %v231, %v244
    %v249 = vadd.f32 %v232, %v245
    %v250 = vld [vmem:[%s197 + $0x3] sm:$0xff]
    %v251 = vld [vmem:[%s197 + $0x13] sm:$0xff]
    %v252 = vld [vmem:[%s197 + $0x23] sm:$0xff]
    %v253 = vld [vmem:[%s197 + $0x33] sm:$0xff]
    %v254 = vld [vmem:[%s202 + $0x3] sm:$0x1]
    %v255 = vlaneseq
    %v256 = vshrl.u32 %v255, 7
    %v257 = vsub.s32 0, %v256
    %v258 = vrot.slane %v254, %v257
    %v259 = vmul.f32 %v250, %v258
    %v260 = vmul.f32 %v251, %v258
    %v261 = vmul.f32 %v252, %v258
    %v262 = vmul.f32 %v253, %v258
    %v263 = vadd.f32 %v246, %v259
    %v264 = vadd.f32 %v247, %v260
    %v265 = vadd.f32 %v248, %v261
    %v266 = vadd.f32 %v249, %v262
    %v267 = vld [vmem:[%s197 + $0x4] sm:$0xff]
    %v268 = vld [vmem:[%s197 + $0x14] sm:$0xff]
    %v269 = vld [vmem:[%s197 + $0x24] sm:$0xff]
    %v270 = vld [vmem:[%s197 + $0x34] sm:$0xff]
    %v271 = vld [vmem:[%s202 + $0x4] sm:$0x1]
    %v272 = vlaneseq
    %v273 = vshrl.u32 %v272, 7
    %v274 = vsub.s32 0, %v273
    %v275 = vrot.slane %v271, %v274
    %v276 = vmul.f32 %v267, %v275
    %v277 = vmul.f32 %v268, %v275
    %v278 = vmul.f32 %v269, %v275
    %v279 = vmul.f32 %v270, %v275
    %v280 = vadd.f32 %v263, %v276
    %v281 = vadd.f32 %v264, %v277
    %v282 = vadd.f32 %v265, %v278
    %v283 = vadd.f32 %v266, %v279
    %s284 = scalar_lea.vmem %s0, 48
    %v285 = vld [vmem:[%s284] sm:$0xff]
    %v286 = vld [vmem:[%s284 + $0x10] sm:$0xff]
    %v287 = vld [vmem:[%s284 + $0x20] sm:$0xff]
    %v288 = vld [vmem:[%s284 + $0x30] sm:$0xff]
    %s289 = scalar_lea.vmem %s1, 24
    %v290 = vld [vmem:[%s289] sm:$0x1]
    %v291 = vlaneseq
    %v292 = vshrl.u32 %v291, 7
    %v293 = vsub.s32 0, %v292
    %v294 = vrot.slane %v290, %v293
    %v295 = vmul.f32 %v285, %v294
    %v296 = vmul.f32 %v286, %v294
    %v297 = vmul.f32 %v287, %v294
    %v298 = vmul.f32 %v288, %v294
    %v299 = vadd.f32 %v280, %v295
    %v300 = vadd.f32 %v281, %v296
    %v301 = vadd.f32 %v282, %v297
    %v302 = vadd.f32 %v283, %v298
    %v303 = vld [vmem:[%s284 + $0x1] sm:$0xff]
    %v304 = vld [vmem:[%s284 + $0x11] sm:$0xff]
    %v305 = vld [vmem:[%s284 + $0x21] sm:$0xff]
    %v306 = vld [vmem:[%s284 + $0x31] sm:$0xff]
    %v307 = vld [vmem:[%s289 + $0x1] sm:$0x1]
    %v308 = vlaneseq
    %v309 = vshrl.u32 %v308, 7
    %v310 = vsub.s32 0, %v309
    %v311 = vrot.slane %v307, %v310
    %v312 = vmul.f32 %v303, %v311
    %v313 = vmul.f32 %v304, %v311
    %v314 = vmul.f32 %v305, %v311
    %v315 = vmul.f32 %v306, %v311
    %v316 = vadd.f32 %v299, %v312
    %v317 = vadd.f32 %v300, %v313
    %v318 = vadd.f32 %v301, %v314
    %v319 = vadd.f32 %v302, %v315
    %v320 = vld [vmem:[%s284 + $0x2] sm:$0xff]
    %v321 = vld [vmem:[%s284 + $0x12] sm:$0xff]
    %v322 = vld [vmem:[%s284 + $0x22] sm:$0xff]
    %v323 = vld [vmem:[%s284 + $0x32] sm:$0xff]
    %v324 = vld [vmem:[%s289 + $0x2] sm:$0x1]
    %v325 = vlaneseq
    %v326 = vshrl.u32 %v325, 7
    %v327 = vsub.s32 0, %v326
    %v328 = vrot.slane %v324, %v327
    %v329 = vmul.f32 %v320, %v328
    %v330 = vmul.f32 %v321, %v328
    %v331 = vmul.f32 %v322, %v328
    %v332 = vmul.f32 %v323, %v328
    %v333 = vadd.f32 %v316, %v329
    %v334 = vadd.f32 %v317, %v330
    %v335 = vadd.f32 %v318, %v331
    %v336 = vadd.f32 %v319, %v332
    %v337 = vld [vmem:[%s284 + $0x3] sm:$0xff]
    %v338 = vld [vmem:[%s284 + $0x13] sm:$0xff]
    %v339 = vld [vmem:[%s284 + $0x23] sm:$0xff]
    %v340 = vld [vmem:[%s284 + $0x33] sm:$0xff]
    %v341 = vld [vmem:[%s289 + $0x3] sm:$0x1]
    %v342 = vlaneseq
    %v343 = vshrl.u32 %v342, 7
    %v344 = vsub.s32 0, %v343
    %v345 = vrot.slane %v341, %v344
    %v346 = vmul.f32 %v337, %v345
    %v347 = vmul.f32 %v338, %v345
    %v348 = vmul.f32 %v339, %v345
    %v349 = vmul.f32 %v340, %v345
    %v350 = vadd.f32 %v333, %v346
    %v351 = vadd.f32 %v334, %v347
    %v352 = vadd.f32 %v335, %v348
    %v353 = vadd.f32 %v336, %v349
    %v354 = vld [vmem:[%s284 + $0x4] sm:$0xff]
    %v355 = vld [vmem:[%s284 + $0x14] sm:$0xff]
    %v356 = vld [vmem:[%s284 + $0x24] sm:$0xff]
    %v357 = vld [vmem:[%s284 + $0x34] sm:$0xff]
    %v358 = vld [vmem:[%s289 + $0x4] sm:$0x1]
    %v359 = vlaneseq
    %v360 = vshrl.u32 %v359, 7
    %v361 = vsub.s32 0, %v360
    %v362 = vrot.slane %v358, %v361
    %v363 = vmul.f32 %v354, %v362
    %v364 = vmul.f32 %v355, %v362
    %v365 = vmul.f32 %v356, %v362
    %v366 = vmul.f32 %v357, %v362
    %v367 = vadd.f32 %v350, %v363
    %v368 = vadd.f32 %v351, %v364
    %v369 = vadd.f32 %v352, %v365
    %v370 = vadd.f32 %v353, %v366
    %s371 = scalar_lea.vmem %s0, 64
    %v372 = vld [vmem:[%s371] sm:$0xff]
    %v373 = vld [vmem:[%s371 + $0x10] sm:$0xff]
    %v374 = vld [vmem:[%s371 + $0x20] sm:$0xff]
    %v375 = vld [vmem:[%s371 + $0x30] sm:$0xff]
    %s376 = scalar_lea.vmem %s1, 32
    %v377 = vld [vmem:[%s376] sm:$0x1]
    %v378 = vlaneseq
    %v379 = vshrl.u32 %v378, 7
    %v380 = vsub.s32 0, %v379
    %v381 = vrot.slane %v377, %v380
    %v382 = vmul.f32 %v372, %v381
    %v383 = vmul.f32 %v373, %v381
    %v384 = vmul.f32 %v374, %v381
    %v385 = vmul.f32 %v375, %v381
    %v386 = vadd.f32 %v367, %v382
    %v387 = vadd.f32 %v368, %v383
    %v388 = vadd.f32 %v369, %v384
    %v389 = vadd.f32 %v370, %v385
    %v390 = vld [vmem:[%s371 + $0x1] sm:$0xff]
    %v391 = vld [vmem:[%s371 + $0x11] sm:$0xff]
    %v392 = vld [vmem:[%s371 + $0x21] sm:$0xff]
    %v393 = vld [vmem:[%s371 + $0x31] sm:$0xff]
    %v394 = vld [vmem:[%s376 + $0x1] sm:$0x1]
    %v395 = vlaneseq
    %v396 = vshrl.u32 %v395, 7
    %v397 = vsub.s32 0, %v396
    %v398 = vrot.slane %v394, %v397
    %v399 = vmul.f32 %v390, %v398
    %v400 = vmul.f32 %v391, %v398
    %v401 = vmul.f32 %v392, %v398
    %v402 = vmul.f32 %v393, %v398
    %v403 = vadd.f32 %v386, %v399
    %v404 = vadd.f32 %v387, %v400
    %v405 = vadd.f32 %v388, %v401
    %v406 = vadd.f32 %v389, %v402
    %v407 = vld [vmem:[%s371 + $0x2] sm:$0xff]
    %v408 = vld [vmem:[%s371 + $0x12] sm:$0xff]
    %v409 = vld [vmem:[%s371 + $0x22] sm:$0xff]
    %v410 = vld [vmem:[%s371 + $0x32] sm:$0xff]
    %v411 = vld [vmem:[%s376 + $0x2] sm:$0x1]
    %v412 = vlaneseq
    %v413 = vshrl.u32 %v412, 7
    %v414 = vsub.s32 0, %v413
    %v415 = vrot.slane %v411, %v414
    %v416 = vmul.f32 %v407, %v415
    %v417 = vmul.f32 %v408, %v415
    %v418 = vmul.f32 %v409, %v415
    %v419 = vmul.f32 %v410, %v415
    %v420 = vadd.f32 %v403, %v416
    %v421 = vadd.f32 %v404, %v417
    %v422 = vadd.f32 %v405, %v418
    %v423 = vadd.f32 %v406, %v419
    %v424 = vld [vmem:[%s371 + $0x3] sm:$0xff]
    %v425 = vld [vmem:[%s371 + $0x13] sm:$0xff]
    %v426 = vld [vmem:[%s371 + $0x23] sm:$0xff]
    %v427 = vld [vmem:[%s371 + $0x33] sm:$0xff]
    %v428 = vld [vmem:[%s376 + $0x3] sm:$0x1]
    %v429 = vlaneseq
    %v430 = vshrl.u32 %v429, 7
    %v431 = vsub.s32 0, %v430
    %v432 = vrot.slane %v428, %v431
    %v433 = vmul.f32 %v424, %v432
    %v434 = vmul.f32 %v425, %v432
    %v435 = vmul.f32 %v426, %v432
    %v436 = vmul.f32 %v427, %v432
    %v437 = vadd.f32 %v420, %v433
    %v438 = vadd.f32 %v421, %v434
    %v439 = vadd.f32 %v422, %v435
    %v440 = vadd.f32 %v423, %v436
    %v441 = vld [vmem:[%s371 + $0x4] sm:$0xff]
    %v442 = vld [vmem:[%s371 + $0x14] sm:$0xff]
    %v443 = vld [vmem:[%s371 + $0x24] sm:$0xff]
    %v444 = vld [vmem:[%s371 + $0x34] sm:$0xff]
    %v445 = vld [vmem:[%s376 + $0x4] sm:$0x1]
    %v446 = vlaneseq
    %v447 = vshrl.u32 %v446, 7
    %v448 = vsub.s32 0, %v447
    %v449 = vrot.slane %v445, %v448
    %v450 = vmul.f32 %v441, %v449
    %v451 = vmul.f32 %v442, %v449
    %v452 = vmul.f32 %v443, %v449
    %v453 = vmul.f32 %v444, %v449
    %v454 = vadd.f32 %v437, %v450
    %v455 = vadd.f32 %v438, %v451
    %v456 = vadd.f32 %v439, %v452
    %v457 = vadd.f32 %v440, %v453
    %v458 = vld [vmem:[%s2] sm:$0x1]
    %v460 = vlaneseq
    %v461 = vshrl.u32 %v460, 7
    %v462 = vsub.s32 0, %v461
    %v463 = vrot.slane %v458, %v462
    %v465 = vmul.f32 %v454, %v463
    %v466 = vmul.f32 %v455, %v463
    %v467 = vmul.f32 %v456, %v463
    %v468 = vmul.f32 %v457, %v463
    %v469 = vld [vmem:[%s3] sm:$0x1]
    %v471 = vlaneseq
    %v472 = vshrl.u32 %v471, 7
    %v473 = vsub.s32 0, %v472
    %v474 = vrot.slane %v469, %v473
    %v476 = vadd.f32 %v465, %v474
    %v477 = vadd.f32 %v466, %v474
    %v478 = vadd.f32 %v467, %v474
    %v479 = vadd.f32 %v468, %v474
    %v480 = vpack.c.bf16 %v477, %v476
    %v481 = vpack.c.bf16 %v479, %v478
    %v482 = vld [vmem:[%s4] sm:$0xf]
    %v483 = vld [vmem:[%s4 + $0x4] sm:$0xf]
    %v484 = vld [vmem:[%s4 + $0x8] sm:$0xf]
    %v485 = vld [vmem:[%s5] sm:$0x1]
    %v487 = vlaneseq
    %v488 = vshrl.u32 %v487, 7
    %v489 = vsub.s32 0, %v488
    %v490 = vrot.slane %v485, %v489
    %v495 = vunpack.c.l.b16 %v482
    %v496 = vunpack.c.l.b16 %v483
    %v497 = vunpack.c.l.b16 %v484
    %v498 = vpack.c.b16 %v496, %v495
    %v499 = vpack.c.b16 %v497, %v497
    %vm501 = vcmask 195584
    %v503 = vsel %vm501, %v480, 0
    %v506 = vsel %vm501, %v481, 0
    %vm508 = vcmask 1043456
    %v510 = vsel %vm508, %v499, 0
    %512 = vmatprep.subr.bf16.mxu0 0
    %513 = vmatpush1.bf16.msra.mxu0 0
    %514 = vmatprep.subr.bf16.mxu0 0
    %515 = vmatpush1.bf16.msra.mxu0 0
    %516 = vmatprep.subr.bf16.mxu0 0
    %517 = vmatpush1.bf16.msra.mxu0 0
    %518 = vmatprep.subr.bf16.mxu0 0
    %519 = vmatpush1.bf16.msra.mxu0 0
    %520 = vmatprep.subr.bf16.mxu0 0
    %521 = vmatpush1.bf16.msra.mxu0 0
    %522 = vmatprep.subr.bf16.mxu0 0
    %523 = vmatpush1.bf16.msra.mxu0 0
    %524 = vmatprep.subr.bf16.mxu0 0
    %525 = vmatpush1.bf16.msra.mxu0 %v510
    %526 = vmatprep.subr.bf16.mxu0 0
    %527 = vmatpush1.bf16.msra.mxu0 %v498
    %528 = vmatprep.subr.bf16.mxu0 0
    %529 = vmatpush2.bf16.msra.mxu0 0
    %530 = vmatprep.subr.bf16.mxu0 0
    %531 = vmatpush2.bf16.msra.mxu0 0
    %532 = vmatprep.subr.bf16.mxu0 0
    %533 = vmatpush2.bf16.msra.mxu0 0
    %534 = vmatprep.subr.bf16.mxu0 0
    %535 = vmatpush2.bf16.msra.mxu0 0
    %536 = vmatprep.subr.bf16.mxu0 0
    %537 = vmatpush2.bf16.msra.mxu0 0
    %538 = vmatprep.subr.bf16.mxu0 0
    %539 = vmatpush2.bf16.msra.mxu0 0
    %540 = vmatprep.subr.bf16.mxu0 0
    %541 = vmatpush2.bf16.msra.mxu0 0
    %542 = vmatprep.subr.bf16.mxu0 0
    %543 = vmatpush2.bf16.msra.mxu0 0
    %544 = vmatprep.mubr.bf16.mxu0 0
    %545 = vmatmul.mubr.bf16.gmra.mxu0 %v503
    %v546 = vpop.f32.mrf.mxu0
    %v547 = vadd.f32 %v490, %v546
    %v548 = vpop.f32.mrf.mxu0
    %v549 = vpop.f32.mrf.mxu0
    %v550 = vadd.f32 %v490, %v549
    %v551 = vpop.f32.mrf.mxu0
    %552 = vmatprep.mubr.bf16.mxu0 0
    %553 = vmatmul.mubr.bf16.gmra.mxu0 %v506
    %v554 = vpop.f32.mrf.mxu0
    %v555 = vadd.f32 %v490, %v554
    %v556 = vpop.f32.mrf.mxu0
    %v557 = vpop.f32.mrf.mxu0
    %v558 = vadd.f32 %v490, %v557
    %v559 = vpop.f32.mrf.mxu0
    %560 = vdwg.mxu0
    %v561 = vmax.f32 %v547, 0.0
    %v562 = vmax.f32 %v550, 0.0
    %v563 = vmax.f32 %v555, 0.0
    %v564 = vmax.f32 %v558, 0.0
    %vm565 = vcmask 523264
    %566 = vst.msk [vmem:[#allocation2] sm:$0xff] %vm565, %v561
    %567 = vst.msk [vmem:[#allocation2 + $0x8] sm:$0xff] %vm565, %v562
    %568 = vst.msk [vmem:[#allocation2 + $0x10] sm:$0xff] %vm565, %v563
    %569 = vst.msk [vmem:[#allocation2 + $0x18] sm:$0xff] %vm565, %v564
    // Predicated region
    $region26: #{tpu_custom_call.1} parent=1 // pred_check
      _
    $region27: #{tpu_custom_call.1} parent=1 // pred_check_branch
      %571 = sbr.rel (0) target = $region29
    $region28: #{tpu_custom_call.1} parent=1 // pred_region
      %s573 = ssub.s32 512, 512
      %574 = vsyncadd [#allocation3], %s573
      %s575 = sshll.u32 [#allocation2], 4
      %s576 = int_to_ptr.vmem [resolvable:$true] %s575
      %581 = dma.vmem_to_hbm [thread:$0]  %s576, 512, %s6, [#allocation3], 128, 128, 8
    $region29: #{tpu_custom_call.1} parent=1 // pred_fallthru
      _
    // Predicated region
    $region30: #{tpu_custom_call.1} parent=1 // pred_check
      _
    $region31: #{tpu_custom_call.1} parent=1 // pred_check_branch
      %583 = sbr.rel (0) target = $region33
    $region32: #{tpu_custom_call.1} parent=1 // pred_region
      %584 = dma.done [#allocation3], 512
    $region33: #{tpu_custom_call.1} parent=1 // pred_fallthru
      _
    %585 = vsyncpa [#allocation3], 1

</llo_original>
